<compile_context>
chip_gen: v7x
topology: tpu7x:2x2x1
jax: 0.10.0
libtpu: 0.0.40
codegen_flags: <defaults>
</compile_context>

<pallas_src>
import functools

import jax
import jax.numpy as jnp
from jax.experimental import pallas as pl
from jax.experimental.pallas import tpu as pltpu


_ACTS = {
    "relu": lambda x: jnp.maximum(x, 0.0),
    "sigmoid": jax.nn.sigmoid,
    "tanh": jnp.tanh,
    "linear": lambda x: x,
}

_LANE = 128
_EPS = 1e-5


def _ceil_to(x, m):
    return (x + m - 1) // m * m


def _floor_to(x, m):
    return max((x // m) * m, m)


def _pad2(a, shape):
    return jnp.pad(a, [(0, s - d) for d, s in zip(a.shape, shape)])


def _vmem_limit_bytes():
    """Generation-aware VMEM limit: ~80% of physical capacity.

    v5e/v6e: 128 MiB physical -> ~102 MiB limit; v7x: 64 MiB -> ~51 MiB, which
    leaves headroom for compiler scratch instead of the old hardcoded 64 MiB.
    """
    cap = 128 * 1024 * 1024
    try:
        cap = int(pltpu.get_tpu_info().vmem_capacity_bytes)
    except Exception:
        pass
    return max(int(cap * 0.8), 32 * 1024 * 1024)


def _param_spec(shape):
    """Grid-invariant parameter BlockSpec, single-buffered when supported."""
    idx_map = lambda i: (0, 0)
    try:
        return pl.BlockSpec(shape, idx_map, pipeline_mode=pl.Buffered(1))
    except (TypeError, AttributeError):
        return pl.BlockSpec(shape, idx_map)


def _make_kernel(hidden_layers, activation_hidden, activation_output,
                 batch_norm, batch_true, mask_padded_rows):
    act_h = _ACTS[activation_hidden]
    act_o = _ACTS[activation_output]
    inv_b = 1.0 / float(batch_true)
    need_mask = batch_norm and mask_padded_rows and hidden_layers > 1

    def kernel(*refs):
        x_ref, o_ref = refs[0], refs[-1]
        idx = 1
        h = x_ref[...]

        # Hoisted once: (tile_b, 1) padded-row mask.  JAX does not CSE
        # iota/broadcast, so rebuilding it per layer costs a full VPU pass.
        if need_mask:
            rows = jax.lax.broadcasted_iota(jnp.int32, (x_ref.shape[0], 1), 0)
            rowmask = (rows < batch_true).astype(jnp.float32)

        for layer in range(hidden_layers):
            w = refs[idx][...]
            idx += 1
            # MXU matmul with f32 accumulation.  `w` may already be bf16
            # (pre-cast in the wrapper) for native MXU throughput; `h` is cast
            # to match.  Padded K rows of w are zero.
            h = jnp.dot(h.astype(w.dtype), w,
                        preferred_element_type=jnp.float32)
            if batch_norm:
                gamma = refs[idx][...]
                beta = refs[idx + 1][...]
                idx += 2
                # One-pass batch statistics (biased var, PyTorch training-mode
                # BN).  The Linear bias is omitted above: BN's mean
                # subtraction cancels it exactly.  Padded batch rows are zero
                # here, so sums over the padded tile divided by the *true*
                # batch size are exact.
                s = jnp.sum(h, axis=0, keepdims=True)
                ss = jnp.sum(h * h, axis=0, keepdims=True)
                mu = s * inv_b
                var = jnp.maximum(ss * inv_b - mu * mu, 0.0)  # cancellation guard
                scale = gamma * jax.lax.rsqrt(var + _EPS)     # gamma pad lanes = 0
                shift = beta - mu * scale
                h = h * scale + shift                         # single FMA pass
            else:
                b = refs[idx][...]
                idx += 1
                h = h + b
            h = act_h(h)
            if need_mask and layer < hidden_layers - 1:
                # Zero padded batch rows (BN shift made them nonzero) so they
                # do not pollute the next layer's batch statistics.
                h = h * rowmask

        # Output layer: [B,K] x [K,1] would waste ~all MXU lanes, so use a VPU
        # multiply + XLU lane reduction.  Padded lanes of h may be nonzero
        # (sigmoid(0)=0.5, BN shift, ...); correctness relies on wo's padded
        # lanes being zero (guaranteed by jnp.pad in the wrapper) -- keep it so.
        wo = refs[idx][...]            # (1, K_pad) f32 output weight row
        bo = refs[idx + 1][0, 0]       # scalar bias from SMEM
        out = jnp.sum(h * wo, axis=-1, keepdims=True) + bo
        # TODO(synk): lane-dense output store (batch in lanes) if the vst.msk
        # partial stores ever show up as a wall-compute gap; output is B*4 B.
        o_ref[...] = act_o(out)

    return kernel


def init_params(key, input_size, hidden_layers, neurons_per_layer, batch_norm):
    """PyTorch-like init: Linear weights stored [in, out], biases [1, out]."""
    params = []
    fan_in = input_size
    for _ in range(hidden_layers):
        key, kw, kb = jax.random.split(key, 3)
        bound = 1.0 / float(fan_in) ** 0.5
        params.append(jax.random.uniform(kw, (fan_in, neurons_per_layer),
                                         jnp.float32, -bound, bound))
        params.append(jax.random.uniform(kb, (1, neurons_per_layer),
                                         jnp.float32, -bound, bound))
        if batch_norm:
            params.append(jnp.ones((1, neurons_per_layer), jnp.float32))   # gamma
            params.append(jnp.zeros((1, neurons_per_layer), jnp.float32))  # beta
        fan_in = neurons_per_layer
    key, kw, kb = jax.random.split(key, 3)
    bound = 1.0 / float(fan_in) ** 0.5
    params.append(jax.random.uniform(kw, (fan_in, 1), jnp.float32, -bound, bound))
    params.append(jax.random.uniform(kb, (1, 1), jnp.float32, -bound, bound))
    return params


@functools.partial(jax.jit, static_argnames=("hidden_layers", "activation_hidden",
                                             "activation_output", "batch_norm",
                                             "use_bf16_matmul"))
def dense_model_bn(x, params, *, hidden_layers, activation_hidden="relu",
                   activation_output="linear", batch_norm=False,
                   use_bf16_matmul=True):
    batch, feat = x.shape
    mm_dtype = jnp.bfloat16 if use_bf16_matmul else jnp.float32
    sub = 16 if use_bf16_matmul else 8       # bf16 packs 2 rows per sublane
    f_pad = _ceil_to(feat, _LANE)

    # ---- lane-dense zero padding of parameters -------------------------------
    # Invariant: padded weight rows/cols, padded gamma lanes, and the padded
    # lanes of the output weight row are ZERO.  Nonzero padded-lane
    # activations rely on this to stay out of the result.
    kparams = []
    idx = 0
    k_pad = f_pad
    widths = []
    for _ in range(hidden_layers):
        w, b = params[idx], params[idx + 1]
        idx += 2
        n_pad = _ceil_to(w.shape[1], _LANE)
        widths.append(n_pad)
        kparams.append(_pad2(w, (k_pad, n_pad)).astype(mm_dtype))
        if batch_norm:
            gamma, beta = params[idx], params[idx + 1]
            idx += 2
            kparams.append(_pad2(gamma, (1, n_pad)))
            kparams.append(_pad2(beta, (1, n_pad)))
            # Linear bias skipped under BN (cancelled by the mean subtraction).
        else:
            kparams.append(_pad2(b, (1, n_pad)))
        k_pad = n_pad
    wo, bo = params[idx], params[idx + 1]
    kparams.append(_pad2(wo.T, (1, k_pad)))            # lane-dense f32 output row
    kparams.append(bo)                                 # (1,1) scalar -> SMEM

    vmem_limit = _vmem_limit_bytes()
    # TODO(synk): layer-streaming path (pltpu.emit_pipeline / per-layer grid
    # axis) once the padded weights no longer fit the VMEM budget; all
    # parameters are resident (single-buffered) here.

    # ---- batch tiling --------------------------------------------------------
    if batch_norm:
        # BN statistics span the full batch: keep the whole (padded) batch
        # resident in one tile so the statistics stay exact.
        # TODO(synk): cross-tile (two-pass / Welford) BN statistics once
        # b_pad * max(N_pad) * 4 B + resident weights approaches ~half of VMEM
        # (hit ~2x sooner on v7x's 64 MiB); additionally split the batch over
        # v7x's two TensorCores with a shared-memory reduction -- single-tile
        # BN currently runs on one TensorCore.
        tile_b = _ceil_to(batch, sub)
        n_tiles = 1
    else:
        # Size the batch tile from the VMEM budget left after resident params.
        param_bytes = sum(int(p.size) * jnp.dtype(p.dtype).itemsize
                          for p in kparams[:-1])
        max_np = max(widths)
        per_row = (f_pad * jnp.dtype(mm_dtype).itemsize * 2   # x tile, 2 buffers
                   + max_np * 4 * 3                           # live f32 activations
                   + (max_np * 2 if use_bf16_matmul else 0))  # bf16 cast copy
        avail = vmem_limit - param_bytes - (4 << 20)
        cap = _floor_to(max(avail // per_row, sub), sub)
        tile_b = max(min(_ceil_to(batch, sub), cap, 2048), sub)
        n_tiles = -(-batch // tile_b)
        if n_tiles > 1 and n_tiles % 2 == 1:
            # Even grid length balances the two TensorCores on megacore parts.
            n_tiles += 1
            tile_b = max(_ceil_to(-(-batch // n_tiles), sub), sub)
    b_pad = tile_b * n_tiles

    x_p = _pad2(x, (b_pad, f_pad)).astype(mm_dtype)

    kernel = _make_kernel(hidden_layers, activation_hidden, activation_output,
                          batch_norm, batch, mask_padded_rows=(b_pad > batch))

    in_specs = [pl.BlockSpec((tile_b, f_pad), lambda i: (i, 0))]
    in_specs += [_param_spec(p.shape) for p in kparams[:-1]]
    in_specs.append(pl.BlockSpec(memory_space=pltpu.MemorySpace.SMEM))

    out = pl.pallas_call(
        kernel,
        out_shape=jax.ShapeDtypeStruct((b_pad, 1), jnp.float32),
        grid=(n_tiles,),
        in_specs=in_specs,
        out_specs=pl.BlockSpec((tile_b, 1), lambda i: (i, 0)),
        compiler_params=pltpu.CompilerParams(
            dimension_semantics=("parallel",),
            vmem_limit_bytes=vmem_limit),
    )(x_p, *kparams)
    return out[:batch]


def _reference(x, params, hidden_layers, activation_hidden, activation_output,
               batch_norm, eps=_EPS):
    """Pure-JAX reference with faithful PyTorch forward semantics."""
    act_h = _ACTS[activation_hidden]
    act_o = _ACTS[activation_output]
    idx = 0
    h = x
    for _ in range(hidden_layers):
        w, b = params[idx], params[idx + 1]
        idx += 2
        h = h @ w + b
        if batch_norm:
            g, be = params[idx], params[idx + 1]
            idx += 2
            mu = jnp.mean(h, axis=0, keepdims=True)
            var = jnp.mean((h - mu) ** 2, axis=0, keepdims=True)
            h = (h - mu) / jnp.sqrt(var + eps) * g + be
        h = act_h(h)
    return act_o(h @ params[idx] + params[idx + 1])


if __name__ == "__main__":
    configs = [
        # (batch, input, layers, neurons, act_h, act_o, batch_norm, bf16, tol)
        (8, 32, 2, 16, "relu", "linear", True, False, 5e-4),
        (10, 20, 1, 24, "tanh", "sigmoid", False, False, 5e-4),
        (6, 16, 2, 8, "sigmoid", "linear", True, True, 5e-2),
        (12, 32, 2, 16, "relu", "linear", False, True, 5e-2),
    ]
    key = jax.random.PRNGKey(0)
    for (batch, input_size, hidden_layers, neurons,
         act_h, act_o, bn, bf16, tol) in configs:
        key, kx, kp = jax.random.split(key, 3)
        x = jax.random.normal(kx, (batch, input_size), dtype=jnp.float32)
        params = init_params(kp, input_size, hidden_layers, neurons, bn)
        out = dense_model_bn(
            x, params,
            hidden_layers=hidden_layers,
            activation_hidden=act_h,
            activation_output=act_o,
            batch_norm=bn,
            use_bf16_matmul=bf16,
        )
        out = jax.block_until_ready(out)
        ref = _reference(x, params, hidden_layers, act_h, act_o, bn)
        assert out.shape == (batch, 1), out.shape
        assert jnp.allclose(out, ref, atol=tol, rtol=tol), (
            f"mismatch vs JAX reference for config "
            f"{(batch, input_size, hidden_layers, neurons, act_h, act_o, bn, bf16)}")
    print("KERNEL_OK")
</pallas_src>

<mosaic_0001>
module attributes {stable_mosaic.version = 11 : i64} {
  func.func @kernel(%arg0: i32, %arg1: memref<8x128xf32, #tpu.memory_space<vmem>>, %arg2: memref<128x128xf32, #tpu.memory_space<vmem>>, %arg3: memref<1x128xf32, #tpu.memory_space<vmem>>, %arg4: memref<1x128xf32, #tpu.memory_space<vmem>>, %arg5: memref<128x128xf32, #tpu.memory_space<vmem>>, %arg6: memref<1x128xf32, #tpu.memory_space<vmem>>, %arg7: memref<1x128xf32, #tpu.memory_space<vmem>>, %arg8: memref<1x128xf32, #tpu.memory_space<vmem>>, %arg9: memref<1x1xf32, #tpu.memory_space<smem>>, %arg10: memref<8x1xf32, #tpu.memory_space<vmem>>) attributes {dimension_semantics = [#tpu.dimension_semantics<parallel>], iteration_bounds = array<i64: 1>, scalar_prefetch = 0 : i64, scratch_operands = 0 : i64, tpu.core_type = #tpu.core_type<tc>, window_params = [{transform_indices = @transform_0, window_bounds = array<i64: 8, 128>}, {pipeline_mode = #tpu.pipeline_mode<synchronous>, transform_indices = @transform_1, window_bounds = array<i64: 128, 128>}, {pipeline_mode = #tpu.pipeline_mode<synchronous>, transform_indices = @transform_2, window_bounds = array<i64: 1, 128>}, {pipeline_mode = #tpu.pipeline_mode<synchronous>, transform_indices = @transform_3, window_bounds = array<i64: 1, 128>}, {pipeline_mode = #tpu.pipeline_mode<synchronous>, transform_indices = @transform_4, window_bounds = array<i64: 128, 128>}, {pipeline_mode = #tpu.pipeline_mode<synchronous>, transform_indices = @transform_5, window_bounds = array<i64: 1, 128>}, {pipeline_mode = #tpu.pipeline_mode<synchronous>, transform_indices = @transform_6, window_bounds = array<i64: 1, 128>}, {pipeline_mode = #tpu.pipeline_mode<synchronous>, transform_indices = @transform_7, window_bounds = array<i64: 1, 128>}, {transform_indices = @transform_8, window_bounds = array<i64: 1, 1>}, {transform_indices = @transform_9, window_bounds = array<i64: 8, 1>}]} {
    %c0 = arith.constant 0 : index
    %c0_0 = arith.constant 0 : index
    %0 = vector.load %arg1[%c0, %c0_0] : memref<8x128xf32, #tpu.memory_space<vmem>>, vector<8x128xf32>
    %c0_1 = arith.constant 0 : index
    %c0_2 = arith.constant 0 : index
    %1 = vector.load %arg2[%c0_1, %c0_2] : memref<128x128xf32, #tpu.memory_space<vmem>>, vector<128x128xf32>
    %cst = arith.constant dense<0.000000e+00> : vector<8x128xf32>
    %2 = tpu.matmul %0, %1, %cst {dimension_numbers = #tpu.dot_dimension_numbers<[1], [0], [0], [1], [0, 0, 1, 1], [], []>} : vector<8x128xf32>, vector<128x128xf32>, vector<8x128xf32> -> vector<8x128xf32>
    %c0_3 = arith.constant 0 : index
    %c0_4 = arith.constant 0 : index
    %3 = vector.load %arg3[%c0_3, %c0_4] : memref<1x128xf32, #tpu.memory_space<vmem>>, vector<1x128xf32>
    %c0_5 = arith.constant 0 : index
    %c0_6 = arith.constant 0 : index
    %4 = vector.load %arg4[%c0_5, %c0_6] : memref<1x128xf32, #tpu.memory_space<vmem>>, vector<1x128xf32>
    %cst_7 = arith.constant dense<0.000000e+00> : vector<128xf32>
    %5 = vector.multi_reduction <add>, %2, %cst_7 [0] : vector<8x128xf32> to vector<128xf32>
    %6 = vector.shape_cast %5 : vector<128xf32> to vector<1x128xf32>
    %7 = arith.mulf %2, %2 : vector<8x128xf32>
    %cst_8 = arith.constant dense<0.000000e+00> : vector<128xf32>
    %8 = vector.multi_reduction <add>, %7, %cst_8 [0] : vector<8x128xf32> to vector<128xf32>
    %9 = vector.shape_cast %8 : vector<128xf32> to vector<1x128xf32>
    %cst_9 = arith.constant 1.250000e-01 : f32
    %10 = vector.broadcast %cst_9 : f32 to vector<1x128xf32>
    %11 = arith.mulf %6, %10 : vector<1x128xf32>
    %cst_10 = arith.constant 1.250000e-01 : f32
    %12 = vector.broadcast %cst_10 : f32 to vector<1x128xf32>
    %13 = arith.mulf %9, %12 : vector<1x128xf32>
    %14 = arith.mulf %11, %11 : vector<1x128xf32>
    %15 = arith.subf %13, %14 : vector<1x128xf32>
    %cst_11 = arith.constant 0.000000e+00 : f32
    %16 = vector.broadcast %cst_11 : f32 to vector<1x128xf32>
    %17 = arith.maximumf %15, %16 : vector<1x128xf32>
    %cst_12 = arith.constant 9.99999974E-6 : f32
    %18 = vector.broadcast %cst_12 : f32 to vector<1x128xf32>
    %19 = arith.addf %17, %18 : vector<1x128xf32>
    %20 = math.rsqrt %19 : vector<1x128xf32>
    %21 = arith.mulf %3, %20 : vector<1x128xf32>
    %22 = arith.mulf %11, %21 : vector<1x128xf32>
    %23 = arith.subf %4, %22 : vector<1x128xf32>
    %24 = vector.broadcast %21 : vector<1x128xf32> to vector<8x128xf32>
    %25 = arith.mulf %2, %24 : vector<8x128xf32>
    %26 = vector.broadcast %23 : vector<1x128xf32> to vector<8x128xf32>
    %27 = arith.addf %25, %26 : vector<8x128xf32>
    %cst_13 = arith.constant 0.000000e+00 : f32
    %28 = vector.broadcast %cst_13 : f32 to vector<8x128xf32>
    %29 = arith.maximumf %27, %28 : vector<8x128xf32>
    %c0_14 = arith.constant 0 : index
    %c0_15 = arith.constant 0 : index
    %30 = vector.load %arg5[%c0_14, %c0_15] : memref<128x128xf32, #tpu.memory_space<vmem>>, vector<128x128xf32>
    %cst_16 = arith.constant dense<0.000000e+00> : vector<8x128xf32>
    %31 = tpu.matmul %29, %30, %cst_16 {dimension_numbers = #tpu.dot_dimension_numbers<[1], [0], [0], [1], [0, 0, 1, 1], [], []>} : vector<8x128xf32>, vector<128x128xf32>, vector<8x128xf32> -> vector<8x128xf32>
    %c0_17 = arith.constant 0 : index
    %c0_18 = arith.constant 0 : index
    %32 = vector.load %arg6[%c0_17, %c0_18] : memref<1x128xf32, #tpu.memory_space<vmem>>, vector<1x128xf32>
    %c0_19 = arith.constant 0 : index
    %c0_20 = arith.constant 0 : index
    %33 = vector.load %arg7[%c0_19, %c0_20] : memref<1x128xf32, #tpu.memory_space<vmem>>, vector<1x128xf32>
    %cst_21 = arith.constant dense<0.000000e+00> : vector<128xf32>
    %34 = vector.multi_reduction <add>, %31, %cst_21 [0] : vector<8x128xf32> to vector<128xf32>
    %35 = vector.shape_cast %34 : vector<128xf32> to vector<1x128xf32>
    %36 = arith.mulf %31, %31 : vector<8x128xf32>
    %cst_22 = arith.constant dense<0.000000e+00> : vector<128xf32>
    %37 = vector.multi_reduction <add>, %36, %cst_22 [0] : vector<8x128xf32> to vector<128xf32>
    %38 = vector.shape_cast %37 : vector<128xf32> to vector<1x128xf32>
    %cst_23 = arith.constant 1.250000e-01 : f32
    %39 = vector.broadcast %cst_23 : f32 to vector<1x128xf32>
    %40 = arith.mulf %35, %39 : vector<1x128xf32>
    %cst_24 = arith.constant 1.250000e-01 : f32
    %41 = vector.broadcast %cst_24 : f32 to vector<1x128xf32>
    %42 = arith.mulf %38, %41 : vector<1x128xf32>
    %43 = arith.mulf %40, %40 : vector<1x128xf32>
    %44 = arith.subf %42, %43 : vector<1x128xf32>
    %cst_25 = arith.constant 0.000000e+00 : f32
    %45 = vector.broadcast %cst_25 : f32 to vector<1x128xf32>
    %46 = arith.maximumf %44, %45 : vector<1x128xf32>
    %cst_26 = arith.constant 9.99999974E-6 : f32
    %47 = vector.broadcast %cst_26 : f32 to vector<1x128xf32>
    %48 = arith.addf %46, %47 : vector<1x128xf32>
    %49 = math.rsqrt %48 : vector<1x128xf32>
    %50 = arith.mulf %32, %49 : vector<1x128xf32>
    %51 = arith.mulf %40, %50 : vector<1x128xf32>
    %52 = arith.subf %33, %51 : vector<1x128xf32>
    %53 = vector.broadcast %50 : vector<1x128xf32> to vector<8x128xf32>
    %54 = arith.mulf %31, %53 : vector<8x128xf32>
    %55 = vector.broadcast %52 : vector<1x128xf32> to vector<8x128xf32>
    %56 = arith.addf %54, %55 : vector<8x128xf32>
    %cst_27 = arith.constant 0.000000e+00 : f32
    %57 = vector.broadcast %cst_27 : f32 to vector<8x128xf32>
    %58 = arith.maximumf %56, %57 : vector<8x128xf32>
    %c0_28 = arith.constant 0 : index
    %c0_29 = arith.constant 0 : index
    %59 = vector.load %arg8[%c0_28, %c0_29] : memref<1x128xf32, #tpu.memory_space<vmem>>, vector<1x128xf32>
    %c0_30 = arith.constant 0 : index
    %c0_31 = arith.constant 0 : index
    %60 = memref.load %arg9[%c0_30, %c0_31] : memref<1x1xf32, #tpu.memory_space<smem>>
    %61 = vector.broadcast %59 : vector<1x128xf32> to vector<8x128xf32>
    %62 = arith.mulf %58, %61 : vector<8x128xf32>
    %cst_32 = arith.constant dense<0.000000e+00> : vector<8xf32>
    %63 = vector.multi_reduction <add>, %62, %cst_32 [1] : vector<8x128xf32> to vector<8xf32>
    %64 = vector.shape_cast %63 : vector<8xf32> to vector<8x1xf32>
    %65 = vector.broadcast %60 : f32 to vector<8x1xf32>
    %66 = arith.addf %64, %65 : vector<8x1xf32>
    %c0_33 = arith.constant 0 : index
    %c0_34 = arith.constant 0 : index
    %67 = vector.load %arg10[%c0_33, %c0_34] : memref<8x1xf32, #tpu.memory_space<vmem>>, vector<8x1xf32>
    tpu.vector_store %arg10[%c0_33, %c0_34], %66 {strides = array<i32>} : memref<8x1xf32, #tpu.memory_space<vmem>>, vector<8x1xf32>,
    return
  }
  func.func @transform_0(%arg0: i32) -> (i32, i32) {
    %c0_i32 = arith.constant 0 : i32
    %c0_i32_0 = arith.constant 0 : i32
    return %arg0, %c0_i32 : i32, i32
  }
  func.func @transform_1(%arg0: i32) -> (i32, i32) {
    %c0_i32 = arith.constant 0 : i32
    %c0_i32_0 = arith.constant 0 : i32
    %c0_i32_1 = arith.constant 0 : i32
    return %c0_i32, %c0_i32_0 : i32, i32
  }
  func.func @transform_2(%arg0: i32) -> (i32, i32) {
    %c0_i32 = arith.constant 0 : i32
    %c0_i32_0 = arith.constant 0 : i32
    %c0_i32_1 = arith.constant 0 : i32
    return %c0_i32, %c0_i32_0 : i32, i32
  }
  func.func @transform_3(%arg0: i32) -> (i32, i32) {
    %c0_i32 = arith.constant 0 : i32
    %c0_i32_0 = arith.constant 0 : i32
    %c0_i32_1 = arith.constant 0 : i32
    return %c0_i32, %c0_i32_0 : i32, i32
  }
  func.func @transform_4(%arg0: i32) -> (i32, i32) {
    %c0_i32 = arith.constant 0 : i32
    %c0_i32_0 = arith.constant 0 : i32
    %c0_i32_1 = arith.constant 0 : i32
    return %c0_i32, %c0_i32_0 : i32, i32
  }
  func.func @transform_5(%arg0: i32) -> (i32, i32) {
    %c0_i32 = arith.constant 0 : i32
    %c0_i32_0 = arith.constant 0 : i32
    %c0_i32_1 = arith.constant 0 : i32
    return %c0_i32, %c0_i32_0 : i32, i32
  }
  func.func @transform_6(%arg0: i32) -> (i32, i32) {
    %c0_i32 = arith.constant 0 : i32
    %c0_i32_0 = arith.constant 0 : i32
    %c0_i32_1 = arith.constant 0 : i32
    return %c0_i32, %c0_i32_0 : i32, i32
  }
  func.func @transform_7(%arg0: i32) -> (i32, i32) {
    %c0_i32 = arith.constant 0 : i32
    %c0_i32_0 = arith.constant 0 : i32
    %c0_i32_1 = arith.constant 0 : i32
    return %c0_i32, %c0_i32_0 : i32, i32
  }
  func.func @transform_8(%arg0: i32) -> (i32, i32) {
    %c0_i32 = arith.constant 0 : i32
    %c0_i32_0 = arith.constant 0 : i32
    %c0_i32_1 = arith.constant 0 : i32
    return %c0_i32, %c0_i32_0 : i32, i32
  }
  func.func @transform_9(%arg0: i32) -> (i32, i32) {
    %c0_i32 = arith.constant 0 : i32
    %c0_i32_0 = arith.constant 0 : i32
    return %arg0, %c0_i32 : i32, i32
  }
}

</mosaic_0001>

<llo_original>
// kernel: dense_model_bn.1
$region0: #{dense_model_bn.1}
  #allocation0 [shape = 'u32[]', space=smem, size = 0x4, offset = 0x4, fixed_abs, tag = 'smem constant byte address 0x4 - core index']
  #allocation1 [shape = 'u32[144,128]{1,0:T(1,128)}', space=vmem, size = 0x12000, scoped, tag = 'internal scratch']
  #allocation2 [shape = 'f32[1,1]{1,0:T(1,128)S(6)}', space=smem, size = 0x200, scoped, tag = 'scoped memory for dense_model_bn.1']
  %s0 = inlined_call_operand.hbm [shape: f32[8,128], index: 0, kind: input, shape index: {}]
  %s1 = inlined_call_operand.hbm [shape: f32[128,128], index: 1, kind: input, shape index: {}]
  %s2 = inlined_call_operand.hbm [shape: f32[1,128], index: 2, kind: input, shape index: {}]
  %s3 = inlined_call_operand.hbm [shape: f32[1,128], index: 3, kind: input, shape index: {}]
  %s4 = inlined_call_operand.hbm [shape: f32[128,128], index: 4, kind: input, shape index: {}]
  %s5 = inlined_call_operand.hbm [shape: f32[1,128], index: 5, kind: input, shape index: {}]
  %s6 = inlined_call_operand.hbm [shape: f32[1,128], index: 6, kind: input, shape index: {}]
  %s7 = inlined_call_operand.hbm [shape: f32[1,128], index: 7, kind: input, shape index: {}]
  %s8 = inlined_call_operand.<no memory space> [shape: f32[1,1], index: 8, kind: input, shape index: {}]
  %s9 = inlined_call_operand.hbm [shape: f32[8,1], index: 9, kind: output, shape index: {}]
  %s10 = sld [smem:[#allocation0]]
  $region78: #{dense_model_bn.1} parent=0
    _
  %s12 = ssub.s32 1, %s10
  %s13 = scalar_select 0, %s12, %s10
  %14 = sst [smem:[#allocation2]] %s8
  $region1: #{dense_model_bn.1} parent=0
    #allocation3 [shape = 'u8[4096]{0}', space=vmem, size = 0x1000, scoped, tag = 'input window, operand 0, single buffered']
    #allocation4 [shape = 's32[1]{0}', space=sflag, size = 0x4, scoped, tag = 'scoped memory for dense_model_bn.1']
    #allocation5 [shape = 's32[1]{0}', space=sflag, size = 0x4, scoped, tag = 'scoped memory for dense_model_bn.1']
    #allocation6 [shape = 'u8[65536]{0}', space=vmem, size = 0x10000, scoped, tag = 'input window, operand 1, single buffered']
    #allocation7 [shape = 's32[1]{0}', space=sflag, size = 0x4, scoped, tag = 'scoped memory for dense_model_bn.1']
    #allocation8 [shape = 'u8[512]{0}', space=vmem, size = 0x400, scoped, tag = 'input window, operand 2, single buffered']
    #allocation9 [shape = 'u8[512]{0}', space=vmem, size = 0x400, scoped, tag = 'input window, operand 3, single buffered']
    #allocation10 [shape = 's32[1]{0}', space=sflag, size = 0x4, scoped, tag = 'scoped memory for dense_model_bn.1']
    #allocation11 [shape = 'u8[65536]{0}', space=vmem, size = 0x10000, scoped, tag = 'input window, operand 4, single buffered']
    #allocation12 [shape = 'u8[512]{0}', space=vmem, size = 0x400, scoped, tag = 'input window, operand 5, single buffered']
    #allocation13 [shape = 's32[1]{0}', space=sflag, size = 0x4, scoped, tag = 'scoped memory for dense_model_bn.1']
    #allocation14 [shape = 'u8[512]{0}', space=vmem, size = 0x400, scoped, tag = 'input window, operand 6, single buffered']
    #allocation15 [shape = 'u8[512]{0}', space=vmem, size = 0x400, scoped, tag = 'input window, operand 7, single buffered']
    #allocation16 [shape = 's32[1]{0}', space=sflag, size = 0x4, scoped, tag = 'scoped memory for dense_model_bn.1']
    #allocation17 [shape = 'u8[4096]{0}', space=vmem, size = 0x1000, scoped, tag = 'output window, operand 0, single buffered']
    %15 = vsyncpa [#allocation4], 0
    %16 = vsyncpa [#allocation7], 0
    %17 = vsyncpa [#allocation10], 0
    %18 = vsyncpa [#allocation13], 0
    %19 = vsyncpa [#allocation16], 0
    %20 = vsyncpa [#allocation5], 0
    // Predicated region
    $region2: #{dense_model_bn.1} parent=1 // pred_check
      _
    $region3: #{dense_model_bn.1} parent=1 // pred_check_branch
      %22 = sbr.rel (0) target = $region5
    $region4: #{dense_model_bn.1} parent=1 // pred_region
      %s24 = ssub.s32 128, 128
      %25 = vsyncadd [#allocation4], %s24
      %s27 = sshll.u32 [#allocation3], 4
      %s28 = int_to_ptr.vmem [resolvable:$true] %s27
      %30 = dma.hbm_to_vmem [thread:$0]  %s0, 128, %s28, [#allocation4]
    $region5: #{dense_model_bn.1} parent=1 // pred_fallthru
      _
    // Predicated region
    $region6: #{dense_model_bn.1} parent=1 // pred_check
      _
    $region7: #{dense_model_bn.1} parent=1 // pred_check_branch
      %32 = sbr.rel (0) target = $region9
    $region8: #{dense_model_bn.1} parent=1 // pred_region
      %s34 = ssub.s32 2048, 2048
      %35 = vsyncadd [#allocation7], %s34
      %s36 = sshll.u32 [#allocation6], 4
      %s37 = int_to_ptr.vmem [resolvable:$true] %s36
      %42 = dma.hbm_to_vmem [thread:$0]  %s1, 2048, %s37, [#allocation7], 128, 128, 8
    $region9: #{dense_model_bn.1} parent=1 // pred_fallthru
      _
    // Predicated region
    $region10: #{dense_model_bn.1} parent=1 // pred_check
      _
    $region11: #{dense_model_bn.1} parent=1 // pred_check_branch
      %44 = sbr.rel (0) target = $region13
    $region12: #{dense_model_bn.1} parent=1 // pred_region
      %s46 = ssub.s32 16, 16
      %47 = vsyncadd [#allocation7], %s46
      %s49 = sshll.u32 [#allocation8], 4
      %s50 = int_to_ptr.vmem [resolvable:$true] %s49
      %52 = dma.hbm_to_vmem [thread:$0]  %s2, 16, %s50, [#allocation7]
    $region13: #{dense_model_bn.1} parent=1 // pred_fallthru
      _
    // Predicated region
    $region14: #{dense_model_bn.1} parent=1 // pred_check
      _
    $region15: #{dense_model_bn.1} parent=1 // pred_check_branch
      %54 = sbr.rel (0) target = $region17
    $region16: #{dense_model_bn.1} parent=1 // pred_region
      %s56 = ssub.s32 16, 16
      %57 = vsyncadd [#allocation10], %s56
      %s59 = sshll.u32 [#allocation9], 4
      %s60 = int_to_ptr.vmem [resolvable:$true] %s59
      %62 = dma.hbm_to_vmem [thread:$0]  %s3, 16, %s60, [#allocation10]
    $region17: #{dense_model_bn.1} parent=1 // pred_fallthru
      _
    // Predicated region
    $region18: #{dense_model_bn.1} parent=1 // pred_check
      _
    $region19: #{dense_model_bn.1} parent=1 // pred_check_branch
      %64 = sbr.rel (0) target = $region21
    $region20: #{dense_model_bn.1} parent=1 // pred_region
      %s66 = ssub.s32 2048, 2048
      %67 = vsyncadd [#allocation10], %s66
      %s68 = sshll.u32 [#allocation11], 4
      %s69 = int_to_ptr.vmem [resolvable:$true] %s68
      %74 = dma.hbm_to_vmem [thread:$0]  %s4, 2048, %s69, [#allocation10], 128, 128, 8
    $region21: #{dense_model_bn.1} parent=1 // pred_fallthru
      _
    // Predicated region
    $region22: #{dense_model_bn.1} parent=1 // pred_check
      _
    $region23: #{dense_model_bn.1} parent=1 // pred_check_branch
      %76 = sbr.rel (0) target = $region25
    $region24: #{dense_model_bn.1} parent=1 // pred_region
      %s78 = ssub.s32 16, 16
      %79 = vsyncadd [#allocation13], %s78
      %s81 = sshll.u32 [#allocation12], 4
      %s82 = int_to_ptr.vmem [resolvable:$true] %s81
      %84 = dma.hbm_to_vmem [thread:$0]  %s5, 16, %s82, [#allocation13]
    $region25: #{dense_model_bn.1} parent=1 // pred_fallthru
      _
    // Predicated region
    $region26: #{dense_model_bn.1} parent=1 // pred_check
      _
    $region27: #{dense_model_bn.1} parent=1 // pred_check_branch
      %86 = sbr.rel (0) target = $region29
    $region28: #{dense_model_bn.1} parent=1 // pred_region
      %s88 = ssub.s32 16, 16
      %89 = vsyncadd [#allocation13], %s88
      %s91 = sshll.u32 [#allocation14], 4
      %s92 = int_to_ptr.vmem [resolvable:$true] %s91
      %94 = dma.hbm_to_vmem [thread:$0]  %s6, 16, %s92, [#allocation13]
    $region29: #{dense_model_bn.1} parent=1 // pred_fallthru
      _
    // Predicated region
    $region30: #{dense_model_bn.1} parent=1 // pred_check
      _
    $region31: #{dense_model_bn.1} parent=1 // pred_check_branch
      %96 = sbr.rel (0) target = $region33
    $region32: #{dense_model_bn.1} parent=1 // pred_region
      %s98 = ssub.s32 16, 16
      %99 = vsyncadd [#allocation16], %s98
      %s101 = sshll.u32 [#allocation15], 4
      %s102 = int_to_ptr.vmem [resolvable:$true] %s101
      %104 = dma.hbm_to_vmem [thread:$0]  %s7, 16, %s102, [#allocation16]
    $region33: #{dense_model_bn.1} parent=1 // pred_fallthru
      _
    // Predicated region
    $region34: #{dense_model_bn.1} parent=1 // pred_check
      _
    $region35: #{dense_model_bn.1} parent=1 // pred_check_branch
      %106 = sbr.rel (0) target = $region37
    $region36: #{dense_model_bn.1} parent=1 // pred_region
      _
    $region37: #{dense_model_bn.1} parent=1 // pred_fallthru
      _
    // Predicated region
    $region38: #{dense_model_bn.1} parent=1 // pred_check
      _
    $region39: #{dense_model_bn.1} parent=1 // pred_check_branch
      %108 = sbr.rel (0) target = $region41
    $region40: #{dense_model_bn.1} parent=1 // pred_region
      %109 = dma.done [#allocation4], 128
    $region41: #{dense_model_bn.1} parent=1 // pred_fallthru
      _
    // Predicated region
    $region42: #{dense_model_bn.1} parent=1 // pred_check
      _
    $region43: #{dense_model_bn.1} parent=1 // pred_check_branch
      %111 = sbr.rel (0) target = $region45
    $region44: #{dense_model_bn.1} parent=1 // pred_region
      %112 = dma.done [#allocation7], 2048
    $region45: #{dense_model_bn.1} parent=1 // pred_fallthru
      _
    // Predicated region
    $region46: #{dense_model_bn.1} parent=1 // pred_check
      _
    $region47: #{dense_model_bn.1} parent=1 // pred_check_branch
      %114 = sbr.rel (0) target = $region49
    $region48: #{dense_model_bn.1} parent=1 // pred_region
      %115 = dma.done [#allocation7], 16
    $region49: #{dense_model_bn.1} parent=1 // pred_fallthru
      _
    // Predicated region
    $region50: #{dense_model_bn.1} parent=1 // pred_check
      _
    $region51: #{dense_model_bn.1} parent=1 // pred_check_branch
      %117 = sbr.rel (0) target = $region53
    $region52: #{dense_model_bn.1} parent=1 // pred_region
      %118 = dma.done [#allocation10], 16
    $region53: #{dense_model_bn.1} parent=1 // pred_fallthru
      _
    // Predicated region
    $region54: #{dense_model_bn.1} parent=1 // pred_check
      _
    $region55: #{dense_model_bn.1} parent=1 // pred_check_branch
      %120 = sbr.rel (0) target = $region57
    $region56: #{dense_model_bn.1} parent=1 // pred_region
      %121 = dma.done [#allocation10], 2048
    $region57: #{dense_model_bn.1} parent=1 // pred_fallthru
      _
    // Predicated region
    $region58: #{dense_model_bn.1} parent=1 // pred_check
      _
    $region59: #{dense_model_bn.1} parent=1 // pred_check_branch
      %123 = sbr.rel (0) target = $region61
    $region60: #{dense_model_bn.1} parent=1 // pred_region
      %124 = dma.done [#allocation13], 16
    $region61: #{dense_model_bn.1} parent=1 // pred_fallthru
      _
    // Predicated region
    $region62: #{dense_model_bn.1} parent=1 // pred_check
      _
    $region63: #{dense_model_bn.1} parent=1 // pred_check_branch
      %126 = sbr.rel (0) target = $region65
    $region64: #{dense_model_bn.1} parent=1 // pred_region
      %127 = dma.done [#allocation13], 16
    $region65: #{dense_model_bn.1} parent=1 // pred_fallthru
      _
    // Predicated region
    $region66: #{dense_model_bn.1} parent=1 // pred_check
      _
    $region67: #{dense_model_bn.1} parent=1 // pred_check_branch
      %129 = sbr.rel (0) target = $region69
    $region68: #{dense_model_bn.1} parent=1 // pred_region
      %130 = dma.done [#allocation16], 16
    $region69: #{dense_model_bn.1} parent=1 // pred_fallthru
      _
    %v131 = vld [vmem:[#allocation3] sm:$0xff]
    %v132 = vld [vmem:[#allocation6] sm:$0xff]
    %v133 = vld [vmem:[#allocation6 + $0x8] sm:$0xff]
    %v134 = vld [vmem:[#allocation6 + $0x10] sm:$0xff]
    %v135 = vld [vmem:[#allocation6 + $0x18] sm:$0xff]
    %v136 = vld [vmem:[#allocation6 + $0x20] sm:$0xff]
    %v137 = vld [vmem:[#allocation6 + $0x28] sm:$0xff]
    %v138 = vld [vmem:[#allocation6 + $0x30] sm:$0xff]
    %v139 = vld [vmem:[#allocation6 + $0x38] sm:$0xff]
    %v140 = vld [vmem:[#allocation6 + $0x40] sm:$0xff]
    %v141 = vld [vmem:[#allocation6 + $0x48] sm:$0xff]
    %v142 = vld [vmem:[#allocation6 + $0x50] sm:$0xff]
    %v143 = vld [vmem:[#allocation6 + $0x58] sm:$0xff]
    %v144 = vld [vmem:[#allocation6 + $0x60] sm:$0xff]
    %v145 = vld [vmem:[#allocation6 + $0x68] sm:$0xff]
    %v146 = vld [vmem:[#allocation6 + $0x70] sm:$0xff]
    %v147 = vld [vmem:[#allocation6 + $0x78] sm:$0xff]
    %148 = vmatprep.subr.mxu0 0.0
    %149 = vmatpush1.msra.mxu0 %v132
    %150 = vmatprep.subr.mxu0 0.0
    %151 = vmatpush1.msra.mxu0 %v133
    %152 = vmatprep.subr.mxu0 0.0
    %153 = vmatpush1.msra.mxu0 %v134
    %154 = vmatprep.subr.mxu0 0.0
    %155 = vmatpush1.msra.mxu0 %v135
    %156 = vmatprep.subr.mxu0 0.0
    %157 = vmatpush1.msra.mxu0 %v136
    %158 = vmatprep.subr.mxu0 0.0
    %159 = vmatpush1.msra.mxu0 %v137
    %160 = vmatprep.subr.mxu0 0.0
    %161 = vmatpush1.msra.mxu0 %v138
    %162 = vmatprep.subr.mxu0 0.0
    %163 = vmatpush1.msra.mxu0 %v139
    %164 = vmatprep.subr.mxu0 0.0
    %165 = vmatpush1.msra.mxu0 %v140
    %166 = vmatprep.subr.mxu0 0.0
    %167 = vmatpush1.msra.mxu0 %v141
    %168 = vmatprep.subr.mxu0 0.0
    %169 = vmatpush1.msra.mxu0 %v142
    %170 = vmatprep.subr.mxu0 0.0
    %171 = vmatpush1.msra.mxu0 %v143
    %172 = vmatprep.subr.mxu0 0.0
    %173 = vmatpush1.msra.mxu0 %v144
    %174 = vmatprep.subr.mxu0 0.0
    %175 = vmatpush1.msra.mxu0 %v145
    %176 = vmatprep.subr.mxu0 0.0
    %177 = vmatpush1.msra.mxu0 %v146
    %178 = vmatprep.subr.mxu0 0.0
    %179 = vmatpush1.msra.mxu0 %v147
    %180 = vmatprep.subr.mxu0 0.0
    %181 = vmatpush1.msra.mxu0 0.0
    %182 = vmatprep.subr.mxu0 0.0
    %183 = vmatpush1.msra.mxu0 0.0
    %184 = vmatprep.subr.mxu0 0.0
    %185 = vmatpush1.msra.mxu0 0.0
    %186 = vmatprep.subr.mxu0 0.0
    %187 = vmatpush1.msra.mxu0 0.0
    %188 = vmatprep.subr.mxu0 0.0
    %189 = vmatpush1.msra.mxu0 0.0
    %190 = vmatprep.subr.mxu0 0.0
    %191 = vmatpush1.msra.mxu0 0.0
    %192 = vmatprep.subr.mxu0 0.0
    %193 = vmatpush1.msra.mxu0 0.0
    %194 = vmatprep.subr.mxu0 0.0
    %195 = vmatpush1.msra.mxu0 0.0
    %196 = vmatprep.subr.mxu0 0.0
    %197 = vmatpush1.msra.mxu0 0.0
    %198 = vmatprep.subr.mxu0 0.0
    %199 = vmatpush1.msra.mxu0 0.0
    %200 = vmatprep.subr.mxu0 0.0
    %201 = vmatpush1.msra.mxu0 0.0
    %202 = vmatprep.subr.mxu0 0.0
    %203 = vmatpush1.msra.mxu0 0.0
    %204 = vmatprep.subr.mxu0 0.0
    %205 = vmatpush1.msra.mxu0 0.0
    %206 = vmatprep.subr.mxu0 0.0
    %207 = vmatpush1.msra.mxu0 0.0
    %208 = vmatprep.subr.mxu0 0.0
    %209 = vmatpush1.msra.mxu0 0.0
    %210 = vmatprep.subr.mxu0 0.0
    %211 = vmatpush1.msra.mxu0 0.0
    %212 = vmatprep.mubr.f32.mxu0 0.0
    %213 = vmatmul.mubr.f32.gmra.mrb[0].mxu0 %v131
    %v214 = vpop.f32.mrb[0].mxu0
    %v215 = vadd.f32 0.0, %v214
    %v216 = vpop.f32.mrb[0].mxu0
    %217 = vdwg.mxu0
    %v218 = vld [vmem:[#allocation8] sm:$0x1]
    %v219 = vld [vmem:[#allocation9] sm:$0x1]
    %v220 = vrot.slane %v215, 4
    %v221 = vadd.f32 %v215, %v220
    %v222 = vrot.slane %v221, 2
    %v223 = vadd.f32 %v221, %v222
    %v224 = vrot.slane %v223, 1
    %v225 = vadd.f32 %v223, %v224
    %v226 = vmul.f32 %v215, %v215
    %v227 = vrot.slane %v226, 4
    %v228 = vadd.f32 %v226, %v227
    %v229 = vrot.slane %v228, 2
    %v230 = vadd.f32 %v228, %v229
    %v231 = vrot.slane %v230, 1
    %v232 = vadd.f32 %v230, %v231
    %v233 = vmul.f32 %v225, 0.125
    %v234 = vmul.f32 %v232, 0.125
    %v235 = vmul.f32 %v233, %v233
    %v236 = vsub.f32 %v234, %v235
    %v237 = vmax.f32 %v236, 0.0
    %v238 = vadd.f32 %v237, 1e-05
    %v239 = vrsqrt.pop %v238
    %v240 = vmul.f32 %v218, %v239
    %v241 = vmul.f32 %v233, %v240
    %v242 = vsub.f32 %v219, %v241
    %v244 = vlaneseq
    %v245 = vshrl.u32 %v244, 7
    %v246 = vsub.s32 0, %v245
    %v247 = vrot.slane %v240, %v246
    %v249 = vmul.f32 %v215, %v247
    %v251 = vlaneseq
    %v252 = vshrl.u32 %v251, 7
    %v253 = vsub.s32 0, %v252
    %v254 = vrot.slane %v242, %v253
    %v256 = vadd.f32 %v249, %v254
    %v257 = vmax.f32 %v256, 0.0
    %v258 = vld [vmem:[#allocation11] sm:$0xff]
    %v259 = vld [vmem:[#allocation11 + $0x8] sm:$0xff]
    %v260 = vld [vmem:[#allocation11 + $0x10] sm:$0xff]
    %v261 = vld [vmem:[#allocation11 + $0x18] sm:$0xff]
    %v262 = vld [vmem:[#allocation11 + $0x20] sm:$0xff]
    %v263 = vld [vmem:[#allocation11 + $0x28] sm:$0xff]
    %v264 = vld [vmem:[#allocation11 + $0x30] sm:$0xff]
    %v265 = vld [vmem:[#allocation11 + $0x38] sm:$0xff]
    %v266 = vld [vmem:[#allocation11 + $0x40] sm:$0xff]
    %v267 = vld [vmem:[#allocation11 + $0x48] sm:$0xff]
    %v268 = vld [vmem:[#allocation11 + $0x50] sm:$0xff]
    %v269 = vld [vmem:[#allocation11 + $0x58] sm:$0xff]
    %v270 = vld [vmem:[#allocation11 + $0x60] sm:$0xff]
    %v271 = vld [vmem:[#allocation11 + $0x68] sm:$0xff]
    %v272 = vld [vmem:[#allocation11 + $0x70] sm:$0xff]
    %v273 = vld [vmem:[#allocation11 + $0x78] sm:$0xff]
    %274 = vmatprep.subr.mxu0 0.0
    %275 = vmatpush1.msra.mxu0 %v258
    %276 = vmatprep.subr.mxu0 0.0
    %277 = vmatpush1.msra.mxu0 %v259
    %278 = vmatprep.subr.mxu0 0.0
    %279 = vmatpush1.msra.mxu0 %v260
    %280 = vmatprep.subr.mxu0 0.0
    %281 = vmatpush1.msra.mxu0 %v261
    %282 = vmatprep.subr.mxu0 0.0
    %283 = vmatpush1.msra.mxu0 %v262
    %284 = vmatprep.subr.mxu0 0.0
    %285 = vmatpush1.msra.mxu0 %v263
    %286 = vmatprep.subr.mxu0 0.0
    %287 = vmatpush1.msra.mxu0 %v264
    %288 = vmatprep.subr.mxu0 0.0
    %289 = vmatpush1.msra.mxu0 %v265
    %290 = vmatprep.subr.mxu0 0.0
    %291 = vmatpush1.msra.mxu0 %v266
    %292 = vmatprep.subr.mxu0 0.0
    %293 = vmatpush1.msra.mxu0 %v267
    %294 = vmatprep.subr.mxu0 0.0
    %295 = vmatpush1.msra.mxu0 %v268
    %296 = vmatprep.subr.mxu0 0.0
    %297 = vmatpush1.msra.mxu0 %v269
    %298 = vmatprep.subr.mxu0 0.0
    %299 = vmatpush1.msra.mxu0 %v270
    %300 = vmatprep.subr.mxu0 0.0
    %301 = vmatpush1.msra.mxu0 %v271
    %302 = vmatprep.subr.mxu0 0.0
    %303 = vmatpush1.msra.mxu0 %v272
    %304 = vmatprep.subr.mxu0 0.0
    %305 = vmatpush1.msra.mxu0 %v273
    %306 = vmatprep.subr.mxu0 0.0
    %307 = vmatpush1.msra.mxu0 0.0
    %308 = vmatprep.subr.mxu0 0.0
    %309 = vmatpush1.msra.mxu0 0.0
    %310 = vmatprep.subr.mxu0 0.0
    %311 = vmatpush1.msra.mxu0 0.0
    %312 = vmatprep.subr.mxu0 0.0
    %313 = vmatpush1.msra.mxu0 0.0
    %314 = vmatprep.subr.mxu0 0.0
    %315 = vmatpush1.msra.mxu0 0.0
    %316 = vmatprep.subr.mxu0 0.0
    %317 = vmatpush1.msra.mxu0 0.0
    %318 = vmatprep.subr.mxu0 0.0
    %319 = vmatpush1.msra.mxu0 0.0
    %320 = vmatprep.subr.mxu0 0.0
    %321 = vmatpush1.msra.mxu0 0.0
    %322 = vmatprep.subr.mxu0 0.0
    %323 = vmatpush1.msra.mxu0 0.0
    %324 = vmatprep.subr.mxu0 0.0
    %325 = vmatpush1.msra.mxu0 0.0
    %326 = vmatprep.subr.mxu0 0.0
    %327 = vmatpush1.msra.mxu0 0.0
    %328 = vmatprep.subr.mxu0 0.0
    %329 = vmatpush1.msra.mxu0 0.0
    %330 = vmatprep.subr.mxu0 0.0
    %331 = vmatpush1.msra.mxu0 0.0
    %332 = vmatprep.subr.mxu0 0.0
    %333 = vmatpush1.msra.mxu0 0.0
    %334 = vmatprep.subr.mxu0 0.0
    %335 = vmatpush1.msra.mxu0 0.0
    %336 = vmatprep.subr.mxu0 0.0
    %337 = vmatpush1.msra.mxu0 0.0
    %338 = vmatprep.mubr.f32.mxu0 0.0
    %339 = vmatmul.mubr.f32.gmra.mrb[0].mxu0 %v257
    %v340 = vpop.f32.mrb[0].mxu0
    %v341 = vadd.f32 0.0, %v340
    %v342 = vpop.f32.mrb[0].mxu0
    %343 = vdwg.mxu0
    %v344 = vld [vmem:[#allocation12] sm:$0x1]
    %v345 = vld [vmem:[#allocation14] sm:$0x1]
    %v346 = vrot.slane %v341, 4
    %v347 = vadd.f32 %v341, %v346
    %v348 = vrot.slane %v347, 2
    %v349 = vadd.f32 %v347, %v348
    %v350 = vrot.slane %v349, 1
    %v351 = vadd.f32 %v349, %v350
    %v352 = vmul.f32 %v341, %v341
    %v353 = vrot.slane %v352, 4
    %v354 = vadd.f32 %v352, %v353
    %v355 = vrot.slane %v354, 2
    %v356 = vadd.f32 %v354, %v355
    %v357 = vrot.slane %v356, 1
    %v358 = vadd.f32 %v356, %v357
    %v359 = vmul.f32 %v351, 0.125
    %v360 = vmul.f32 %v358, 0.125
    %v361 = vmul.f32 %v359, %v359
    %v362 = vsub.f32 %v360, %v361
    %v363 = vmax.f32 %v362, 0.0
    %v364 = vadd.f32 %v363, 1e-05
    %v365 = vrsqrt.pop %v364
    %v366 = vmul.f32 %v344, %v365
    %v367 = vmul.f32 %v359, %v366
    %v368 = vsub.f32 %v345, %v367
    %v370 = vlaneseq
    %v371 = vshrl.u32 %v370, 7
    %v372 = vsub.s32 0, %v371
    %v373 = vrot.slane %v366, %v372
    %v375 = vmul.f32 %v341, %v373
    %v377 = vlaneseq
    %v378 = vshrl.u32 %v377, 7
    %v379 = vsub.s32 0, %v378
    %v380 = vrot.slane %v368, %v379
    %v382 = vadd.f32 %v375, %v380
    %v383 = vmax.f32 %v382, 0.0
    %v384 = vld [vmem:[#allocation15] sm:$0x1]
    %s385 = sld [smem:[#allocation2]]
    %v387 = vlaneseq
    %v388 = vshrl.u32 %v387, 7
    %v389 = vsub.s32 0, %v388
    %v390 = vrot.slane %v384, %v389
    %v392 = vmul.f32 %v383, %v390
    %393 = vadd.xlane.f32.xlu0 %v392
    %v394 = vpop.xlane.xlu0 %393
    %v395 = vstv %s385
    %v396 = vadd.f32 %v394, %v395
    %vm397 = vcmask 7168
    %398 = vst.msk [vmem:[#allocation17] sm:$0xff] %vm397, %v396
    // Predicated region
    $region70: #{dense_model_bn.1} parent=1 // pred_check
      _
    $region71: #{dense_model_bn.1} parent=1 // pred_check_branch
      %400 = sbr.rel (0) target = $region73
    $region72: #{dense_model_bn.1} parent=1 // pred_region
      %s402 = ssub.s32 128, 128
      %403 = vsyncadd [#allocation5], %s402
      %s405 = sshll.u32 [#allocation17], 4
      %s406 = int_to_ptr.vmem [resolvable:$true] %s405
      %408 = dma.vmem_to_hbm [thread:$0]  %s406, 128, %s9, [#allocation5]
    $region73: #{dense_model_bn.1} parent=1 // pred_fallthru
      _
    // Predicated region
    $region74: #{dense_model_bn.1} parent=1 // pred_check
      _
    $region75: #{dense_model_bn.1} parent=1 // pred_check_branch
      %410 = sbr.rel (0) target = $region77
    $region76: #{dense_model_bn.1} parent=1 // pred_region
      %411 = dma.done [#allocation5], 128
    $region77: #{dense_model_bn.1} parent=1 // pred_fallthru
      _
    %412 = vsyncpa [#allocation4], 1
    %413 = vsyncpa [#allocation7], 1
    %414 = vsyncpa [#allocation10], 1
    %415 = vsyncpa [#allocation13], 1
    %416 = vsyncpa [#allocation16], 1
    %417 = vsyncpa [#allocation5], 1

</llo_original>
